<compile_context>
chip_gen: v6e
topology: v6e:2x2x1
jax: 0.10.0
libtpu: 0.0.40
codegen_flags: <defaults>
</compile_context>

<pallas_src>
import functools

import jax
import jax.numpy as jnp
from jax.experimental import pallas as pl
from jax.experimental.pallas import tpu as pltpu

_TARGET_BLOCK_BYTES = 2 * 1024 * 1024   # per-buffer DMA block budget (native dtype)
_MIN_BLOCK_BYTES = 512 * 1024           # grow blocks along N below this
_FUSED_F32_BYTES = 2 * 1024 * 1024      # single-pass (VMEM-resident) threshold


def _divisors(n):
    return [d for d in range(1, n + 1) if n % d == 0]


def _choose_blocks(N, C, HW, itemsize):
    """Pick (n_blk, c_blk, hw_blk) with n_blk|N, c_blk|C (mult of 8 or = C),
    hw_blk|HW (mult of 128 or = HW), keeping blocks in the ~0.5-2 MiB range."""
    c_blk = C
    if C * HW * itemsize <= _TARGET_BLOCK_BYTES:
        hw_blk = HW
    else:
        hw_blk = 0
        m = (HW // 128) * 128
        while m >= 128:
            if HW % m == 0 and C * m * itemsize <= _TARGET_BLOCK_BYTES:
                hw_blk = m
                break
            m -= 128
        if hw_blk == 0:
            # HW has no suitable 128-multiple divisor: tile C instead.
            hw_blk = HW
            if C % 8 == 0:
                best = 0
                for d in _divisors(C):
                    if d % 8 == 0 and d * HW * itemsize <= _TARGET_BLOCK_BYTES:
                        best = max(best, d)
                c_blk = best if best else 8
            # else: keep full C (rare; may simply use a larger block).

    # Fold N when each per-image block is tiny (late ResNet layers).
    n_blk = 1
    if c_blk == C and hw_blk == HW:
        per = C * HW * itemsize
        for d in _divisors(N):
            if d > 1 and d * per > _TARGET_BLOCK_BYTES:
                break
            n_blk = d
            if d * per >= _MIN_BLOCK_BYTES:
                break
    return n_blk, c_blk, hw_blk


# ---------------------------------------------------------------------------
# Pass 1: per-channel sum / sum-of-squares, lane-dense (1, Cb, 128) partials.
# Grid = (N-blocks [parallel], C-blocks [parallel], HW-blocks [arbitrary]).
# ---------------------------------------------------------------------------
def _bn_stats_kernel(x_ref, sum_ref, sumsq_ref):
    @pl.when(pl.program_id(2) == 0)
    def _():
        sum_ref[...] = jnp.zeros_like(sum_ref)
        sumsq_ref[...] = jnp.zeros_like(sumsq_ref)

    nb, cb, hw = x_ref.shape
    n_chunks = hw // 128
    rem = hw - n_chunks * 128

    zeros = jnp.zeros((1, cb, 128), jnp.float32)
    ps, pq = zeros, zeros

    if n_chunks:
        def body(i, carry):
            ps, pq = carry
            off = pl.multiple_of(i * 128, 128)
            sl = x_ref[:, :, pl.ds(off, 128)].astype(jnp.float32)   # (nb, cb, 128)
            ps = ps + jnp.sum(sl, axis=0, keepdims=True)
            pq = pq + jnp.sum(sl * sl, axis=0, keepdims=True)
            return ps, pq
        ps, pq = jax.lax.fori_loop(0, n_chunks, body, (ps, pq))

    if rem:  # HW not a multiple of 128 (only when hw_blk == full HW)
        tail = x_ref[:, :, pl.ds(n_chunks * 128, rem)].astype(jnp.float32)
        tsum = jnp.sum(tail, axis=(0, 2), keepdims=True)             # (1, cb, 1)
        tsq = jnp.sum(tail * tail, axis=(0, 2), keepdims=True)
        lane = jax.lax.broadcasted_iota(jnp.int32, (1, cb, 128), 2)
        ps = ps + jnp.where(lane == 0, tsum, 0.0)
        pq = pq + jnp.where(lane == 0, tsq, 0.0)

    sum_ref[...] += ps
    sumsq_ref[...] += pq


# ---------------------------------------------------------------------------
# Pass 2: y = x * scale + shift  (per-channel scale/shift folded in wrapper).
# ---------------------------------------------------------------------------
def _bn_apply_kernel(x_ref, scale_ref, shift_ref, o_ref):
    scale = scale_ref[...][:, :, :1]      # lane-dense load, per-channel slice
    shift = shift_ref[...][:, :, :1]
    x = x_ref[...].astype(jnp.float32)
    o_ref[...] = (x * scale + shift).astype(o_ref.dtype)


# ---------------------------------------------------------------------------
# Fused single-pass kernel for small activations (whole tensor in VMEM):
# stats + affine + write in one HBM read of x.
# ---------------------------------------------------------------------------
def _bn_fused_kernel(x_ref, gamma_ref, beta_ref, o_ref, *, inv_count, eps):
    x = x_ref[...].astype(jnp.float32)                         # (N, C, HW)
    s = jnp.sum(x, axis=(0, 2), keepdims=True)                 # (1, C, 1)
    sq = jnp.sum(x * x, axis=(0, 2), keepdims=True)
    mean = s * inv_count
    var = jnp.maximum(sq * inv_count - mean * mean, 0.0)       # biased variance
    scale = gamma_ref[...] * jax.lax.rsqrt(var + eps)
    shift = beta_ref[...] - mean * scale
    o_ref[...] = (x * scale + shift).astype(o_ref.dtype)


# ---------------------------------------------------------------------------
# Forward wrapper (matches MetaBatchNorm2d.forward / F.batch_norm)
# ---------------------------------------------------------------------------
def meta_batch_norm2d(x, weight, bias, running_mean=None, running_var=None,
                      training=True, eps=1e-5):
    """x: (N, C, H, W); weight/bias: (C,). Returns (N, C, H, W) in x.dtype."""
    N, C, H, W = x.shape
    HW = H * W
    x3 = x.reshape(N, C, HW)                       # free view, native dtype
    out_dtype = x.dtype
    count = N * HW

    use_batch_stats = training or running_mean is None or running_var is None
    w32 = weight.astype(jnp.float32).reshape(1, C, 1)
    b32 = bias.astype(jnp.float32).reshape(1, C, 1)

    # ---- fused single-pass path: whole activation comfortably fits in VMEM.
    if use_batch_stats and N * C * HW * 4 <= _FUSED_F32_BYTES:
        out = pl.pallas_call(
            functools.partial(_bn_fused_kernel,
                              inv_count=1.0 / count, eps=float(eps)),
            out_shape=jax.ShapeDtypeStruct((N, C, HW), out_dtype),
            grid=(1,),
            in_specs=[pl.BlockSpec((N, C, HW), lambda i: (0, 0, 0)),
                      pl.BlockSpec((1, C, 1), lambda i: (0, 0, 0)),
                      pl.BlockSpec((1, C, 1), lambda i: (0, 0, 0))],
            out_specs=pl.BlockSpec((N, C, HW), lambda i: (0, 0, 0)),
            compiler_params=pltpu.CompilerParams(
                dimension_semantics=("arbitrary",),
                vmem_limit_bytes=32 * 1024 * 1024),
        )(x3, w32, b32)
        return out.reshape(N, C, H, W)

    # ---- two-pass path ------------------------------------------------------
    n_blk, c_blk, hw_blk = _choose_blocks(N, C, HW, x.dtype.itemsize)
    n_grp, n_c, n_hw = N // n_blk, C // c_blk, HW // hw_blk
    grid = (n_grp, n_c, n_hw)

    if use_batch_stats:
        psum, psq = pl.pallas_call(
            _bn_stats_kernel,
            out_shape=(jax.ShapeDtypeStruct((n_grp, C, 128), jnp.float32),
                       jax.ShapeDtypeStruct((n_grp, C, 128), jnp.float32)),
            grid=grid,
            in_specs=[pl.BlockSpec((n_blk, c_blk, hw_blk),
                                   lambda n, c, h: (n, c, h))],
            out_specs=(pl.BlockSpec((1, c_blk, 128), lambda n, c, h: (n, c, 0)),
                       pl.BlockSpec((1, c_blk, 128), lambda n, c, h: (n, c, 0))),
            compiler_params=pltpu.CompilerParams(
                dimension_semantics=("parallel", "parallel", "arbitrary")),
        )(x3)
        # Tiny JAX epilogue: combine per-N lane-dense partials (tree combine
        # limits the E[x^2]-E[x]^2 cancellation vs one long serial f32 sum).
        s = jnp.sum(psum, axis=(0, 2))                           # (C,)
        sq = jnp.sum(psq, axis=(0, 2))
        mean = s / count
        var = jnp.maximum(sq / count - mean * mean, 0.0)         # biased
    else:
        mean = running_mean.astype(jnp.float32)
        var = running_var.astype(jnp.float32)

    # Per-channel affine folding:  y = x * scale + shift
    scale_c = w32[0, :, 0] * jax.lax.rsqrt(var + eps)            # (C,)
    shift_c = b32[0, :, 0] - mean * scale_c
    # Lane-dense (1, C, 128) so the apply kernel never does 1-lane masked loads.
    scale = jnp.broadcast_to(scale_c.reshape(1, C, 1), (1, C, 128))
    shift = jnp.broadcast_to(shift_c.reshape(1, C, 1), (1, C, 128))

    out = pl.pallas_call(
        _bn_apply_kernel,
        out_shape=jax.ShapeDtypeStruct((N, C, HW), out_dtype),
        grid=grid,
        in_specs=[pl.BlockSpec((n_blk, c_blk, hw_blk), lambda n, c, h: (n, c, h)),
                  pl.BlockSpec((1, c_blk, 128), lambda n, c, h: (0, c, 0)),
                  pl.BlockSpec((1, c_blk, 128), lambda n, c, h: (0, c, 0))],
        out_specs=pl.BlockSpec((n_blk, c_blk, hw_blk), lambda n, c, h: (n, c, h)),
        compiler_params=pltpu.CompilerParams(
            dimension_semantics=("parallel", "parallel", "parallel")),
    )(x3, scale, shift)
    return out.reshape(N, C, H, W)


# ---------------------------------------------------------------------------
# Pure-JAX references (f32 math)
# ---------------------------------------------------------------------------
def _reference_bn_train(x, gamma, beta, eps):
    x = x.astype(jnp.float32)
    mean = jnp.mean(x, axis=(0, 2, 3), keepdims=True)
    var = jnp.var(x, axis=(0, 2, 3), keepdims=True)               # biased
    g = gamma.astype(jnp.float32).reshape(1, -1, 1, 1)
    b = beta.astype(jnp.float32).reshape(1, -1, 1, 1)
    return (x - mean) * jax.lax.rsqrt(var + eps) * g + b


def _reference_bn_eval(x, gamma, beta, rm, rv, eps):
    x = x.astype(jnp.float32)
    g = gamma.astype(jnp.float32).reshape(1, -1, 1, 1)
    b = beta.astype(jnp.float32).reshape(1, -1, 1, 1)
    m = rm.astype(jnp.float32).reshape(1, -1, 1, 1)
    v = rv.astype(jnp.float32).reshape(1, -1, 1, 1)
    return (x - m) * jax.lax.rsqrt(v + eps) * g + b


if __name__ == "__main__":
    keys = jax.random.split(jax.random.PRNGKey(0), 12)
    bn_fwd = jax.jit(meta_batch_norm2d, static_argnames=("training", "eps"))

    # --- 1) module-default shape, training mode -> fused single-pass path ----
    N, C, H, W = 2, 4, 16, 16
    x = 1.5 * jax.random.normal(keys[0], (N, C, H, W), jnp.float32) + 0.3
    gamma = 1.0 + 0.1 * jax.random.normal(keys[1], (C,), jnp.float32)
    beta = 0.1 * jax.random.normal(keys[2], (C,), jnp.float32)
    rm = jnp.zeros((C,), jnp.float32)       # running stats as in __init__
    rv = jnp.ones((C,), jnp.float32)
    y = jax.block_until_ready(bn_fwd(x, gamma, beta, rm, rv, training=True))
    assert y.shape == x.shape and y.dtype == x.dtype
    y_ref = _reference_bn_train(x, gamma, beta, 1e-5)
    err = float(jnp.max(jnp.abs(y - y_ref)))
    assert jnp.allclose(y, y_ref, atol=1e-4, rtol=1e-4), err

    # --- 2) larger f32, training -> two-pass path with HW-split accumulation -
    N2, C2, H2, W2 = 2, 64, 96, 96
    x2 = jax.random.normal(keys[3], (N2, C2, H2, W2), jnp.float32)
    g2 = 1.0 + 0.1 * jax.random.normal(keys[4], (C2,), jnp.float32)
    b2 = 0.1 * jax.random.normal(keys[5], (C2,), jnp.float32)
    y2 = jax.block_until_ready(bn_fwd(x2, g2, b2, training=True))
    y2_ref = _reference_bn_train(x2, g2, b2, 1e-5)
    err2 = float(jnp.max(jnp.abs(y2 - y2_ref)))
    assert jnp.allclose(y2, y2_ref, atol=2e-3, rtol=2e-3), err2

    # --- 3) bf16 I/O, training -> two-pass, N-folded blocks, HW not %128 -----
    N3, C3, H3, W3 = 8, 64, 56, 56
    x3 = jax.random.normal(keys[6], (N3, C3, H3, W3), jnp.bfloat16)
    g3 = 1.0 + 0.1 * jax.random.normal(keys[7], (C3,), jnp.float32)
    b3 = 0.1 * jax.random.normal(keys[8], (C3,), jnp.float32)
    y3 = jax.block_until_ready(bn_fwd(x3, g3, b3, training=True))
    assert y3.dtype == jnp.bfloat16
    y3_ref = _reference_bn_train(x3, g3, b3, 1e-5)
    err3 = float(jnp.max(jnp.abs(y3.astype(jnp.float32) - y3_ref)))
    assert jnp.allclose(y3.astype(jnp.float32), y3_ref, atol=5e-2, rtol=5e-2), err3

    # --- 4) eval mode (uses running stats) -----------------------------------
    rm4 = 0.2 * jax.random.normal(keys[9], (C2,), jnp.float32)
    rv4 = 1.0 + 0.5 * jax.random.uniform(keys[10], (C2,), jnp.float32)
    x4 = jax.random.normal(keys[11], (2, C2, 16, 16), jnp.float32)
    y4 = jax.block_until_ready(bn_fwd(x4, g2, b2, rm4, rv4, training=False))
    y4_ref = _reference_bn_eval(x4, g2, b2, rm4, rv4, 1e-5)
    err4 = float(jnp.max(jnp.abs(y4 - y4_ref)))
    assert jnp.allclose(y4, y4_ref, atol=1e-4, rtol=1e-4), err4

    print("KERNEL_OK")
</pallas_src>

<mosaic_0001>
module attributes {stable_mosaic.version = 11 : i64} {
  func.func @_bn_fused_kernel(%arg0: i32, %arg1: memref<2x4x256xf32, #tpu.memory_space<vmem>>, %arg2: memref<1x4x1xf32, #tpu.memory_space<vmem>>, %arg3: memref<1x4x1xf32, #tpu.memory_space<vmem>>, %arg4: memref<2x4x256xf32, #tpu.memory_space<vmem>>) attributes {dimension_semantics = [#tpu.dimension_semantics<arbitrary>], iteration_bounds = array<i64: 1>, scalar_prefetch = 0 : i64, scratch_operands = 0 : i64, tpu.core_type = #tpu.core_type<tc>, window_params = [{pipeline_mode = #tpu.pipeline_mode<synchronous>, transform_indices = @transform_0, window_bounds = array<i64: 2, 4, 256>}, {pipeline_mode = #tpu.pipeline_mode<synchronous>, transform_indices = @transform_1, window_bounds = array<i64: 1, 4, 1>}, {pipeline_mode = #tpu.pipeline_mode<synchronous>, transform_indices = @transform_2, window_bounds = array<i64: 1, 4, 1>}, {pipeline_mode = #tpu.pipeline_mode<synchronous>, transform_indices = @transform_3, window_bounds = array<i64: 2, 4, 256>}]} {
    %c0 = arith.constant 0 : index
    %c0_0 = arith.constant 0 : index
    %c0_1 = arith.constant 0 : index
    %0 = vector.load %arg1[%c0, %c0_0, %c0_1] : memref<2x4x256xf32, #tpu.memory_space<vmem>>, vector<2x4x256xf32>
    %cst = arith.constant dense<0.000000e+00> : vector<4xf32>
    %1 = vector.multi_reduction <add>, %0, %cst [0, 2] : vector<2x4x256xf32> to vector<4xf32>
    %2 = vector.shape_cast %1 : vector<4xf32> to vector<1x4x1xf32>
    %3 = arith.mulf %0, %0 : vector<2x4x256xf32>
    %cst_2 = arith.constant dense<0.000000e+00> : vector<4xf32>
    %4 = vector.multi_reduction <add>, %3, %cst_2 [0, 2] : vector<2x4x256xf32> to vector<4xf32>
    %5 = vector.shape_cast %4 : vector<4xf32> to vector<1x4x1xf32>
    %cst_3 = arith.constant 0.001953125 : f32
    %6 = vector.broadcast %cst_3 : f32 to vector<1x4x1xf32>
    %7 = arith.mulf %2, %6 : vector<1x4x1xf32>
    %cst_4 = arith.constant 0.001953125 : f32
    %8 = vector.broadcast %cst_4 : f32 to vector<1x4x1xf32>
    %9 = arith.mulf %5, %8 : vector<1x4x1xf32>
    %10 = arith.mulf %7, %7 : vector<1x4x1xf32>
    %11 = arith.subf %9, %10 : vector<1x4x1xf32>
    %cst_5 = arith.constant 0.000000e+00 : f32
    %12 = vector.broadcast %cst_5 : f32 to vector<1x4x1xf32>
    %13 = arith.maximumf %11, %12 : vector<1x4x1xf32>
    %c0_6 = arith.constant 0 : index
    %c0_7 = arith.constant 0 : index
    %c0_8 = arith.constant 0 : index
    %14 = vector.load %arg2[%c0_6, %c0_7, %c0_8] : memref<1x4x1xf32, #tpu.memory_space<vmem>>, vector<1x4x1xf32>
    %cst_9 = arith.constant 9.99999974E-6 : f32
    %15 = vector.broadcast %cst_9 : f32 to vector<1x4x1xf32>
    %16 = arith.addf %13, %15 : vector<1x4x1xf32>
    %17 = math.rsqrt %16 : vector<1x4x1xf32>
    %18 = arith.mulf %14, %17 : vector<1x4x1xf32>
    %c0_10 = arith.constant 0 : index
    %c0_11 = arith.constant 0 : index
    %c0_12 = arith.constant 0 : index
    %19 = vector.load %arg3[%c0_10, %c0_11, %c0_12] : memref<1x4x1xf32, #tpu.memory_space<vmem>>, vector<1x4x1xf32>
    %20 = arith.mulf %7, %18 : vector<1x4x1xf32>
    %21 = arith.subf %19, %20 : vector<1x4x1xf32>
    %22 = vector.broadcast %18 : vector<1x4x1xf32> to vector<2x4x256xf32>
    %23 = arith.mulf %0, %22 : vector<2x4x256xf32>
    %24 = vector.broadcast %21 : vector<1x4x1xf32> to vector<2x4x256xf32>
    %25 = arith.addf %23, %24 : vector<2x4x256xf32>
    %c0_13 = arith.constant 0 : index
    %c0_14 = arith.constant 0 : index
    %c0_15 = arith.constant 0 : index
    %26 = vector.load %arg4[%c0_13, %c0_14, %c0_15] : memref<2x4x256xf32, #tpu.memory_space<vmem>>, vector<2x4x256xf32>
    tpu.vector_store %arg4[%c0_13, %c0_14, %c0_15], %25 {strides = array<i32>} : memref<2x4x256xf32, #tpu.memory_space<vmem>>, vector<2x4x256xf32>,
    return
  }
  func.func @transform_0(%arg0: i32) -> (i32, i32, i32) {
    %c0_i32 = arith.constant 0 : i32
    %c0_i32_0 = arith.constant 0 : i32
    %c0_i32_1 = arith.constant 0 : i32
    %c0_i32_2 = arith.constant 0 : i32
    return %c0_i32, %c0_i32_0, %c0_i32_1 : i32, i32, i32
  }
  func.func @transform_1(%arg0: i32) -> (i32, i32, i32) {
    %c0_i32 = arith.constant 0 : i32
    %c0_i32_0 = arith.constant 0 : i32
    %c0_i32_1 = arith.constant 0 : i32
    %c0_i32_2 = arith.constant 0 : i32
    return %c0_i32, %c0_i32_0, %c0_i32_1 : i32, i32, i32
  }
  func.func @transform_2(%arg0: i32) -> (i32, i32, i32) {
    %c0_i32 = arith.constant 0 : i32
    %c0_i32_0 = arith.constant 0 : i32
    %c0_i32_1 = arith.constant 0 : i32
    %c0_i32_2 = arith.constant 0 : i32
    return %c0_i32, %c0_i32_0, %c0_i32_1 : i32, i32, i32
  }
  func.func @transform_3(%arg0: i32) -> (i32, i32, i32) {
    %c0_i32 = arith.constant 0 : i32
    %c0_i32_0 = arith.constant 0 : i32
    %c0_i32_1 = arith.constant 0 : i32
    %c0_i32_2 = arith.constant 0 : i32
    return %c0_i32, %c0_i32_0, %c0_i32_1 : i32, i32, i32
  }
}

</mosaic_0001>

<llo_original>
// kernel: meta_batch_norm2d.1
$region0: #{meta_batch_norm2d.1}
  #allocation0 [shape = 'u32[]', space=smem, size = 0x4, offset = 0x4, fixed_abs, tag = 'smem constant byte address 0x4 - core index']
  #allocation1 [shape = 'u32[144,128]{1,0:T(1,128)}', space=vmem, size = 0x12000, scoped, tag = 'internal scratch']
  %s0 = inlined_call_operand.vmem [shape: f32[2,4,256], index: 0, kind: input, shape index: {}]
  %s1 = inlined_call_operand.vmem [shape: f32[1,4,1], index: 1, kind: input, shape index: {}]
  %s2 = inlined_call_operand.vmem [shape: f32[1,4,1], index: 2, kind: input, shape index: {}]
  %s3 = inlined_call_operand.vmem [shape: f32[2,4,256], index: 3, kind: output, shape index: {}]
  %s4 = sld [smem:[#allocation0]]
  $region22: #{meta_batch_norm2d.1} parent=0
    _
  %s6 = ssub.s32 1, %s4
  %s7 = scalar_select 0, %s6, %s4
  // Predicated region
  $region2: #{meta_batch_norm2d.1} parent=0 // pred_check
    _
  $region3: #{meta_batch_norm2d.1} parent=0 // pred_check_branch
    %9 = sbr.rel (0) target = $region5
  $region4: #{meta_batch_norm2d.1} parent=0 // pred_region
    _
  $region5: #{meta_batch_norm2d.1} parent=0 // pred_fallthru
    _
  // Predicated region
  $region6: #{meta_batch_norm2d.1} parent=0 // pred_check
    _
  $region7: #{meta_batch_norm2d.1} parent=0 // pred_check_branch
    %11 = sbr.rel (0) target = $region9
  $region8: #{meta_batch_norm2d.1} parent=0 // pred_region
    _
  $region9: #{meta_batch_norm2d.1} parent=0 // pred_fallthru
    _
  // Predicated region
  $region10: #{meta_batch_norm2d.1} parent=0 // pred_check
    _
  $region11: #{meta_batch_norm2d.1} parent=0 // pred_check_branch
    %13 = sbr.rel (0) target = $region13
  $region12: #{meta_batch_norm2d.1} parent=0 // pred_region
    _
  $region13: #{meta_batch_norm2d.1} parent=0 // pred_fallthru
    _
  %v14 = vld [vmem:[%s0] sm:$0xff]
  %v15 = vld [vmem:[%s0 + $0x8] sm:$0xff]
  %v18 = vcombine.high %v14, %v14
  %v19 = vcombine.high %v15, %v15
  %vm22 = vcmask 1043456
  %v23 = vsel %vm22, %v14, 0.0
  %v24 = vsel %vm22, %v18, 0.0
  %v25 = vadd.f32 %v23, %v24
  %v26 = vsel %vm22, %v15, 0.0
  %v27 = vadd.f32 %v25, %v26
  %v28 = vsel %vm22, %v19, 0.0
  %v29 = vadd.f32 %v27, %v28
  %30 = vadd.xlane.f32.xlu0 %v29
  %v31 = vpop.xlane.xlu0 %30
  %v32 = vmul.f32 %v14, %v14
  %v33 = vmul.f32 %v15, %v15
  %v36 = vcombine.high %v32, %v32
  %v37 = vcombine.high %v33, %v33
  %v40 = vsel %vm22, %v32, 0.0
  %v41 = vsel %vm22, %v36, 0.0
  %v42 = vadd.f32 %v40, %v41
  %v43 = vsel %vm22, %v33, 0.0
  %v44 = vadd.f32 %v42, %v43
  %v45 = vsel %vm22, %v37, 0.0
  %v46 = vadd.f32 %v44, %v45
  %47 = vadd.xlane.f32.xlu0 %v46
  %v48 = vpop.xlane.xlu0 %47
  %v49 = vmul.f32 %v31, 0.001953125
  %v50 = vmul.f32 %v48, 0.001953125
  %v51 = vmul.f32 %v49, %v49
  %v52 = vsub.f32 %v50, %v51
  %v53 = vmax.f32 %v52, 0.0
  %v54 = vld [vmem:[%s1] sm:$0xf]
  %v55 = vadd.f32 %v53, 1e-05
  %v56 = vrsqrt.pop %v55
  %v57 = vmul.f32 %v54, %v56
  %v58 = vld [vmem:[%s2] sm:$0xf]
  %v59 = vmul.f32 %v49, %v57
  %v60 = vsub.f32 %v58, %v59
  %62 = vset.pattern.permute.xlu0 0
  %63 = vperm.xlu0 %62, %v57
  %v64 = vpop.permute.xlu0 %63
  %v66 = vunpack.c.l.s4 839922192
  %v67 = vunpack.c.0.s8 %v66
  %v68 = vlaneseq
  %v69 = vshrl.u32 %v68, 7
  %v70 = vsub.s32 %v67, %v69
  %v71 = vrot.slane %v64, %v70
  %v73 = vmul.f32 %v14, %v71
  %v74 = vmul.f32 %v15, %v71
  %76 = vset.pattern.permute.xlu0 0
  %77 = vperm.xlu0 %76, %v60
  %v78 = vpop.permute.xlu0 %77
  %v80 = vunpack.c.l.s4 839922192
  %v81 = vunpack.c.0.s8 %v80
  %v82 = vlaneseq
  %v83 = vshrl.u32 %v82, 7
  %v84 = vsub.s32 %v81, %v83
  %v85 = vrot.slane %v78, %v84
  %v87 = vadd.f32 %v73, %v85
  %v88 = vadd.f32 %v74, %v85
  %89 = vst [vmem:[%s3] sm:$0xff] %v87
  %90 = vst [vmem:[%s3 + $0x8] sm:$0xff] %v88
  // Predicated region
  $region14: #{meta_batch_norm2d.1} parent=0 // pred_check
    _
  $region15: #{meta_batch_norm2d.1} parent=0 // pred_check_branch
    %92 = sbr.rel (0) target = $region17
  $region16: #{meta_batch_norm2d.1} parent=0 // pred_region
    _
  $region17: #{meta_batch_norm2d.1} parent=0 // pred_fallthru
    _
  // Predicated region
  $region18: #{meta_batch_norm2d.1} parent=0 // pred_check
    _
  $region19: #{meta_batch_norm2d.1} parent=0 // pred_check_branch
    %94 = sbr.rel (0) target = $region21
  $region20: #{meta_batch_norm2d.1} parent=0 // pred_region
    _
  $region21: #{meta_batch_norm2d.1} parent=0 // pred_fallthru
    _

</llo_original>
